<compile_context>
chip_gen: v5e
topology: v5e:2x2
jax: 0.10.0
libtpu: 0.0.40
codegen_flags: <defaults>
</compile_context>

<pallas_src>
import functools

import jax
import jax.numpy as jnp
from jax.experimental import pallas as pl
from jax.experimental.pallas import tpu as pltpu


def _centering_kernel(x_ref, o_ref, *, inv_hw):
    # x_ref / o_ref: (rb, hw_pad) tiles in VMEM.
    x = x_ref[...]
    # Hoist the f32 cast (single cast, reused for mean and subtraction).
    xf = x if x.dtype == jnp.float32 else x.astype(jnp.float32)
    # Padded lanes (if any) are zero, so the sum over the padded axis equals
    # the sum over the real H*W elements; divide by the *real* element count.
    mean = jnp.sum(xf, axis=-1, keepdims=True) * inv_hw
    o_ref[...] = (xf - mean).astype(o_ref.dtype)


def my_bn_2(x: jax.Array) -> jax.Array:
    """x: (N, C, H, W) -> x - mean_{H,W}(x)  (broadcast over H, W)."""
    n, c, h, w = x.shape
    rows = n * c
    hw = h * w
    itemsize = jnp.dtype(x.dtype).itemsize

    # Sublane packing for the dtype (f32: 8, bf16: 16, int8/fp8: 32).
    sub = max(8, 32 // itemsize)

    # Lane-dense output: pad the spatial axis up to a multiple of 128 so
    # stores are full unmasked vreg stores (biggest single lever for small HW).
    hw_pad = ((hw + 127) // 128) * 128

    # ---- pick the row block -------------------------------------------------
    # Mem-bound kernel: biggest block that keeps the double-buffered working
    # set comfortably inside VMEM on every generation (v7x: 64 MiB per TC).
    block_budget = 4 * 1024 * 1024                     # bytes per (rb, hw_pad) block
    rb = block_budget // (hw_pad * itemsize)
    rb = max(sub, (rb // sub) * sub)                   # multiple of sublane packing
    rb = min(rb, 1024)

    rows_ceil = ((rows + sub - 1) // sub) * sub
    # Keep at least 2 grid steps when there is enough work, so the grid can be
    # sharded across v7x's 2 TensorCores (no effect on v5e/v6e).
    if rows_ceil >= 2 * sub:
        rb = min(rb, max(sub, (rows_ceil // 2 // sub) * sub))
    rb = min(rb, rows_ceil)

    rows_pad = ((rows + rb - 1) // rb) * rb
    grid = (rows_pad // rb,)

    x2d = x.reshape(rows, hw)
    if rows_pad != rows or hw_pad != hw:
        x2d = jnp.pad(x2d, ((0, rows_pad - rows), (0, hw_pad - hw)))

    # Scoped-VMEM budget: 2x double-buffered (in + out) blocks + f32 temps,
    # plus headroom; never below the default and never near v7x's 64 MiB cap.
    live_bytes = 4 * rb * hw_pad * itemsize + 2 * rb * hw_pad * 4
    vmem_limit = int(min(max(live_bytes + (8 << 20), 32 << 20), 56 << 20))

    kernel = functools.partial(_centering_kernel, inv_hw=1.0 / float(hw))

    out2d = pl.pallas_call(
        kernel,
        out_shape=jax.ShapeDtypeStruct((rows_pad, hw_pad), x.dtype),
        grid_spec=pltpu.PrefetchScalarGridSpec(
            num_scalar_prefetch=0,
            grid=grid,
            in_specs=[pl.BlockSpec((rb, hw_pad), lambda i: (i, 0))],
            out_specs=pl.BlockSpec((rb, hw_pad), lambda i: (i, 0)),
        ),
        compiler_params=pltpu.CompilerParams(
            dimension_semantics=("parallel",),
            vmem_limit_bytes=vmem_limit,
        ),
    )(x2d)

    if rows_pad != rows or hw_pad != hw:
        out2d = out2d[:rows, :hw]
    return out2d.reshape(n, c, h, w)


if __name__ == "__main__":
    key = jax.random.PRNGKey(0)
    N, C, H, W = 2, 4, 16, 16
    x = jax.random.normal(key, (N, C, H, W), dtype=jnp.float32)

    out = my_bn_2(x)
    out = jax.block_until_ready(out)

    # reference check (plain JAX)
    ref = x - jnp.mean(x, axis=(2, 3), keepdims=True)
    assert out.shape == (N, C, H, W)
    assert jnp.allclose(out, ref, atol=1e-5, rtol=1e-5)

    # extra check: odd row count + non-128-multiple HW (exercises padding path)
    x2 = jax.random.normal(jax.random.PRNGKey(1), (3, 5, 7, 7), dtype=jnp.float32)
    out2 = jax.block_until_ready(my_bn_2(x2))
    ref2 = x2 - jnp.mean(x2, axis=(2, 3), keepdims=True)
    assert jnp.allclose(out2, ref2, atol=1e-5, rtol=1e-5)

    print("KERNEL_OK")
</pallas_src>

<mosaic_0001>
module attributes {stable_mosaic.version = 11 : i64} {
  func.func @_centering_kernel(%arg0: i32, %arg1: memref<8x256xf32, #tpu.memory_space<vmem>>, %arg2: memref<8x256xf32, #tpu.memory_space<vmem>>) attributes {dimension_semantics = [#tpu.dimension_semantics<parallel>], iteration_bounds = array<i64: 1>, scalar_prefetch = 0 : i64, scratch_operands = 0 : i64, tpu.core_type = #tpu.core_type<tc>, window_params = [{transform_indices = @transform_0, window_bounds = array<i64: 8, 256>}, {transform_indices = @transform_1, window_bounds = array<i64: 8, 256>}]} {
    %c0 = arith.constant 0 : index
    %c0_0 = arith.constant 0 : index
    %0 = vector.load %arg1[%c0, %c0_0] : memref<8x256xf32, #tpu.memory_space<vmem>>, vector<8x256xf32>
    %cst = arith.constant dense<0.000000e+00> : vector<8xf32>
    %1 = vector.multi_reduction <add>, %0, %cst [1] : vector<8x256xf32> to vector<8xf32>
    %2 = vector.shape_cast %1 : vector<8xf32> to vector<8x1xf32>
    %cst_1 = arith.constant 3.906250e-03 : f32
    %3 = vector.broadcast %cst_1 : f32 to vector<8x1xf32>
    %4 = arith.mulf %2, %3 : vector<8x1xf32>
    %5 = vector.broadcast %4 : vector<8x1xf32> to vector<8x256xf32>
    %6 = arith.subf %0, %5 : vector<8x256xf32>
    %c0_2 = arith.constant 0 : index
    %c0_3 = arith.constant 0 : index
    %7 = vector.load %arg2[%c0_2, %c0_3] : memref<8x256xf32, #tpu.memory_space<vmem>>, vector<8x256xf32>
    tpu.vector_store %arg2[%c0_2, %c0_3], %6 {strides = array<i32>} : memref<8x256xf32, #tpu.memory_space<vmem>>, vector<8x256xf32>,
    return
  }
  func.func @transform_0(%arg0: i32) -> (i32, i32) {
    %c0_i32 = arith.constant 0 : i32
    %c0_i32_0 = arith.constant 0 : i32
    return %arg0, %c0_i32 : i32, i32
  }
  func.func @transform_1(%arg0: i32) -> (i32, i32) {
    %c0_i32 = arith.constant 0 : i32
    %c0_i32_0 = arith.constant 0 : i32
    return %arg0, %c0_i32 : i32, i32
  }
}

</mosaic_0001>

<llo_original>
// kernel: tpu_custom_call.1
$region0: #{tpu_custom_call.1}
  #allocation0 [shape = 'u32[]', space=smem, size = 0x4, offset = 0x4, fixed_abs, tag = 'smem constant byte address 0x4 - core index']
  #allocation1 [shape = 'u32[72,128]{1,0:T(1,128)}', space=vmem, size = 0x9000, scoped, tag = 'internal scratch']
  %s0 = inlined_call_operand.hbm [shape: f32[8,256], index: 0, kind: input, shape index: {}]
  %s1 = inlined_call_operand.hbm [shape: f32[8,256], index: 1, kind: output, shape index: {}]
  %s2 = sld [smem:[#allocation0]]
  $region18: #{tpu_custom_call.1} parent=0
    _
  %s4 = ssub.s32 1, %s2
  %s5 = scalar_select 0, %s4, %s2
  $region1: #{tpu_custom_call.1} parent=0
    #allocation2 [shape = 'u8[8192]{0}', space=vmem, size = 0x2000, scoped, tag = 'input window, operand 0, single buffered']
    #allocation3 [shape = 's32[1]{0}', space=sflag, size = 0x4, scoped, tag = 'scoped memory for tpu_custom_call.1']
    #allocation4 [shape = 's32[1]{0}', space=sflag, size = 0x4, scoped, tag = 'scoped memory for tpu_custom_call.1']
    #allocation5 [shape = 'u8[8192]{0}', space=vmem, size = 0x2000, scoped, tag = 'output window, operand 0, single buffered']
    %6 = vsyncpa [#allocation3], 0
    %7 = vsyncpa [#allocation4], 0
    // Predicated region
    $region2: #{tpu_custom_call.1} parent=1 // pred_check
      _
    $region3: #{tpu_custom_call.1} parent=1 // pred_check_branch
      %9 = sbr.rel (0) target = $region5
    $region4: #{tpu_custom_call.1} parent=1 // pred_region
      %11 = vsyncadd [#allocation3], 0
      %s13 = sshll.u32 %s0, 4
      %s14 = int_to_ptr.hbm [resolvable:$true] %s13
      %s15 = sshll.u32 [#allocation2], 4
      %s16 = int_to_ptr.vmem [resolvable:$true] %s15
      %18 = dma.hbm_to_vmem [thread:$0]  %s14, 256, %s16, [#allocation3]
    $region5: #{tpu_custom_call.1} parent=1 // pred_fallthru
      _
    // Predicated region
    $region6: #{tpu_custom_call.1} parent=1 // pred_check
      _
    $region7: #{tpu_custom_call.1} parent=1 // pred_check_branch
      %20 = sbr.rel (0) target = $region9
    $region8: #{tpu_custom_call.1} parent=1 // pred_region
      %22 = dma.done [#allocation3], 256
    $region9: #{tpu_custom_call.1} parent=1 // pred_fallthru
      _
    %v23 = vld [vmem:[#allocation2] sm:$0xff]
    %v24 = vld [vmem:[#allocation2 + $0x8] sm:$0xff]
    %v25 = vadd.f32 %v23, %v24
    %26 = vadd.xlane.f32.xlu0 %v25
    %v27 = vpop.xlane.xlu0 %26
    %v28 = vmul.f32 %v27, 0.00390625
    %v29 = vsub.f32 %v23, %v28
    %v30 = vsub.f32 %v24, %v28
    %31 = vst [vmem:[#allocation5] sm:$0xff] %v29
    %32 = vst [vmem:[#allocation5 + $0x8] sm:$0xff] %v30
    // Predicated region
    $region10: #{tpu_custom_call.1} parent=1 // pred_check
      _
    $region11: #{tpu_custom_call.1} parent=1 // pred_check_branch
      %34 = sbr.rel (0) target = $region13
    $region12: #{tpu_custom_call.1} parent=1 // pred_region
      %36 = vsyncadd [#allocation4], 0
      %s38 = sshll.u32 [#allocation5], 4
      %s39 = int_to_ptr.vmem [resolvable:$true] %s38
      %s40 = sshll.u32 %s1, 4
      %s41 = int_to_ptr.hbm [resolvable:$true] %s40
      %43 = dma.vmem_to_hbm [thread:$0]  %s39, 256, %s41, [#allocation4]
    $region13: #{tpu_custom_call.1} parent=1 // pred_fallthru
      _
    // Predicated region
    $region14: #{tpu_custom_call.1} parent=1 // pred_check
      _
    $region15: #{tpu_custom_call.1} parent=1 // pred_check_branch
      %45 = sbr.rel (0) target = $region17
    $region16: #{tpu_custom_call.1} parent=1 // pred_region
      %47 = dma.done [#allocation4], 256
    $region17: #{tpu_custom_call.1} parent=1 // pred_fallthru
      _
    %48 = vsyncpa [#allocation3], 1
    %49 = vsyncpa [#allocation4], 1

</llo_original>
